<compile_context>
chip_gen: v7x
topology: tpu7x:2x2x1
jax: 0.10.0
libtpu: 0.0.40
codegen_flags: <defaults>
</compile_context>

<pallas_src>
import jax
import jax.numpy as jnp
from jax.experimental import pallas as pl
from jax.experimental.pallas import tpu as pltpu

LANE = 128   # vreg lane width
SUB = 8      # vreg sublane count


def _mse_unmasked_kernel(p_ref, t_ref, acc_ref):
    """acc_ref (8,128) f32 accumulates sum((p - t)^2), folded along rows."""

    @pl.when(pl.program_id(1) == 0)
    def _():
        acc_ref[...] = jnp.zeros_like(acc_ref)

    d = p_ref[...].astype(jnp.float32) - t_ref[...].astype(jnp.float32)
    acc_ref[...] += (d * d).reshape(-1, SUB, LANE).sum(axis=0)


def _mse_masked_kernel(p_ref, t_ref, m_ref, acc_ref):
    """acc_ref (2,8,128) f32: [0] = sum((p-t)^2 * m), [1] = sum(m)."""

    @pl.when(pl.program_id(1) == 0)
    def _():
        acc_ref[...] = jnp.zeros_like(acc_ref)

    d = p_ref[...].astype(jnp.float32) - t_ref[...].astype(jnp.float32)
    m = m_ref[...].astype(jnp.float32)
    acc_ref[0] += (d * d * m).reshape(-1, SUB, LANE).sum(axis=0)
    acc_ref[1] += m.reshape(-1, SUB, LANE).sum(axis=0)


def _to_2d(x, rows_padded):
    """Flatten to (rows_padded, 128) in native dtype; pad only if needed."""
    flat = x.reshape(-1)
    pad = rows_padded * LANE - flat.shape[0]
    if pad:  # static Python condition: no copy when already aligned
        flat = jnp.pad(flat, (0, pad))
    return flat.reshape(rows_padded, LANE)


def mse_pallas(y_pred, y_true, mask=None, block_rows=1024, num_cores=2):
    """mean((y_pred - y_true)**2), or sum(loss*mask)/sum(mask) if mask given."""
    n = y_pred.size
    rows = pl.cdiv(n, LANE)

    # Tile rows: multiple of 8 sublanes, never larger than the (rounded) data.
    block_rows = max(SUB, (int(block_rows) // SUB) * SUB)
    block_rows = min(block_rows, pl.cdiv(rows, SUB) * SUB)

    num_blocks = pl.cdiv(rows, block_rows)
    # Split the stream across TensorCores only when there is enough work.
    nc = num_cores if num_blocks >= 2 * num_cores else 1
    num_blocks = pl.cdiv(num_blocks, nc) * nc
    rows_padded = num_blocks * block_rows
    bpc = num_blocks // nc               # blocks per core

    p2 = _to_2d(y_pred, rows_padded)     # native dtype, no host upcast
    t2 = _to_2d(y_true, rows_padded)

    in_blk = pl.BlockSpec((block_rows, LANE), lambda c, i: (c * bpc + i, 0))
    cparams = pltpu.CompilerParams(
        dimension_semantics=("parallel", "arbitrary"))

    if mask is None:
        partials = pl.pallas_call(
            _mse_unmasked_kernel,
            out_shape=jax.ShapeDtypeStruct((nc, SUB, LANE), jnp.float32),
            grid=(nc, bpc),
            in_specs=[in_blk, in_blk],
            out_specs=pl.BlockSpec((None, SUB, LANE), lambda c, i: (c, 0, 0)),
            compiler_params=cparams,
        )(p2, t2)
        # Zero padding contributes 0 to the numerator; exact count is n.
        return (jnp.sum(partials) / n).astype(y_pred.dtype)

    m2 = _to_2d(mask, rows_padded)       # keep mask dtype (bool/int8/f32 ok)
    partials = pl.pallas_call(
        _mse_masked_kernel,
        out_shape=jax.ShapeDtypeStruct((nc, 2, SUB, LANE), jnp.float32),
        grid=(nc, bpc),
        in_specs=[in_blk, in_blk, in_blk],
        out_specs=pl.BlockSpec((None, 2, SUB, LANE), lambda c, i: (c, 0, 0, 0)),
        compiler_params=cparams,
    )(p2, t2, m2)
    sums = jnp.sum(partials, axis=(0, 2, 3))   # -> [sum(loss*m), sum(m)]
    return (sums[0] / sums[1]).astype(y_pred.dtype)


if __name__ == "__main__":
    key = jax.random.PRNGKey(0)
    k1, k2, k3 = jax.random.split(key, 3)

    shape = (2, 4, 16, 16)  # NCHW, small synthetic input
    y_pred = jax.random.normal(k1, shape, dtype=jnp.float32)
    y_true = jax.random.normal(k2, shape, dtype=jnp.float32)
    mask = (jax.random.uniform(k3, shape) > 0.5).astype(jnp.float32)

    # Unmasked case
    out_plain = jax.block_until_ready(mse_pallas(y_pred, y_true))
    ref_plain = jnp.mean((y_pred - y_true) ** 2)
    assert jnp.allclose(out_plain, ref_plain, rtol=1e-5, atol=1e-6), (
        out_plain, ref_plain)

    # Masked case
    out_masked = jax.block_until_ready(mse_pallas(y_pred, y_true, mask))
    ref_masked = jnp.sum(((y_pred - y_true) ** 2) * mask) / jnp.sum(mask)
    assert jnp.allclose(out_masked, ref_masked, rtol=1e-5, atol=1e-6), (
        out_masked, ref_masked)

    # Non-aligned shape exercising padding, multi-block grid and the
    # (parallel, arbitrary) 2-core split path (tiny block_rows on purpose).
    shape2 = (3, 5, 17, 19)
    k4, k5, k6 = jax.random.split(k3, 3)
    p_b = jax.random.normal(k4, shape2, dtype=jnp.float32)
    t_b = jax.random.normal(k5, shape2, dtype=jnp.float32)
    m_b = (jax.random.uniform(k6, shape2) > 0.3).astype(jnp.float32)

    out2m = jax.block_until_ready(mse_pallas(p_b, t_b, m_b, block_rows=8))
    ref2m = jnp.sum(((p_b - t_b) ** 2) * m_b) / jnp.sum(m_b)
    assert jnp.allclose(out2m, ref2m, rtol=1e-5, atol=1e-6), (out2m, ref2m)

    out2u = jax.block_until_ready(mse_pallas(p_b, t_b, block_rows=8))
    ref2u = jnp.mean((p_b - t_b) ** 2)
    assert jnp.allclose(out2u, ref2u, rtol=1e-5, atol=1e-6), (out2u, ref2u)

    # Native-dtype path: inputs streamed as bf16, accumulated in f32 in-kernel.
    pb = y_pred.astype(jnp.bfloat16)
    tb = y_true.astype(jnp.bfloat16)
    out_bf16 = jax.block_until_ready(mse_pallas(pb, tb))
    ref_bf16 = jnp.mean((pb.astype(jnp.float32) - tb.astype(jnp.float32)) ** 2)
    assert jnp.allclose(out_bf16.astype(jnp.float32), ref_bf16,
                        rtol=2e-2, atol=2e-2), (out_bf16, ref_bf16)

    print("KERNEL_OK")
</pallas_src>

<mosaic_0001>
module attributes {stable_mosaic.version = 11 : i64} {
  func.func @_mse_unmasked_kernel(%arg0: i32, %arg1: i32, %arg2: memref<16x128xf32, #tpu.memory_space<vmem>>, %arg3: memref<16x128xf32, #tpu.memory_space<vmem>>, %arg4: memref<1x8x128xf32, #tpu.memory_space<vmem>>) attributes {dimension_semantics = [#tpu.dimension_semantics<parallel>, #tpu.dimension_semantics<arbitrary>], iteration_bounds = array<i64: 1, 1>, scalar_prefetch = 0 : i64, scratch_operands = 0 : i64, tpu.core_type = #tpu.core_type<tc>, window_params = [{transform_indices = @transform_0, window_bounds = array<i64: 16, 128>}, {transform_indices = @transform_1, window_bounds = array<i64: 16, 128>}, {transform_indices = @transform_2, window_bounds = array<i64: 1, 8, 128>}]} {
    %c0_i32 = arith.constant 0 : i32
    %0 = arith.cmpi eq, %arg1, %c0_i32 : i32
    %1 = arith.extui %0 : i1 to i32
    %c0_i32_0 = arith.constant 0 : i32
    %2 = arith.cmpi ne, %1, %c0_i32_0 : i32
    scf.if %2 {
      %cst_10 = arith.constant 0.000000e+00 : f32
      %15 = vector.broadcast %cst_10 : f32 to vector<8x128xf32>
      %c0_11 = arith.constant 0 : index
      %c0_12 = arith.constant 0 : index
      %c0_13 = arith.constant 0 : index
      %16 = vector.load %arg4[%c0_11, %c0_12, %c0_13] : memref<1x8x128xf32, #tpu.memory_space<vmem>>, vector<1x8x128xf32>
      %17 = vector.shape_cast %16 : vector<1x8x128xf32> to vector<8x128xf32>
      %18 = vector.shape_cast %15 : vector<8x128xf32> to vector<1x8x128xf32>
      tpu.vector_store %arg4[%c0_11, %c0_12, %c0_13], %18 {strides = array<i32>} : memref<1x8x128xf32, #tpu.memory_space<vmem>>, vector<1x8x128xf32>,
    } else {
    }
    %c0 = arith.constant 0 : index
    %c0_1 = arith.constant 0 : index
    %3 = vector.load %arg2[%c0, %c0_1] : memref<16x128xf32, #tpu.memory_space<vmem>>, vector<16x128xf32>
    %c0_2 = arith.constant 0 : index
    %c0_3 = arith.constant 0 : index
    %4 = vector.load %arg3[%c0_2, %c0_3] : memref<16x128xf32, #tpu.memory_space<vmem>>, vector<16x128xf32>
    %5 = arith.subf %3, %4 : vector<16x128xf32>
    %c0_4 = arith.constant 0 : index
    %c0_5 = arith.constant 0 : index
    %c0_6 = arith.constant 0 : index
    %6 = vector.load %arg4[%c0_4, %c0_5, %c0_6] : memref<1x8x128xf32, #tpu.memory_space<vmem>>, vector<1x8x128xf32>
    %7 = vector.shape_cast %6 : vector<1x8x128xf32> to vector<8x128xf32>
    %8 = arith.mulf %5, %5 : vector<16x128xf32>
    %9 = vector.shape_cast %8 : vector<16x128xf32> to vector<2x8x128xf32>
    %cst = arith.constant dense<0.000000e+00> : vector<8x128xf32>
    %10 = vector.multi_reduction <add>, %9, %cst [0] : vector<2x8x128xf32> to vector<8x128xf32>
    %11 = arith.addf %7, %10 : vector<8x128xf32>
    %c0_7 = arith.constant 0 : index
    %c0_8 = arith.constant 0 : index
    %c0_9 = arith.constant 0 : index
    %12 = vector.load %arg4[%c0_7, %c0_8, %c0_9] : memref<1x8x128xf32, #tpu.memory_space<vmem>>, vector<1x8x128xf32>
    %13 = vector.shape_cast %12 : vector<1x8x128xf32> to vector<8x128xf32>
    %14 = vector.shape_cast %11 : vector<8x128xf32> to vector<1x8x128xf32>
    tpu.vector_store %arg4[%c0_7, %c0_8, %c0_9], %14 {strides = array<i32>} : memref<1x8x128xf32, #tpu.memory_space<vmem>>, vector<1x8x128xf32>,
    return
  }
  func.func @transform_0(%arg0: i32, %arg1: i32) -> (i32, i32) {
    %c1_i32 = arith.constant 1 : i32
    %0 = arith.muli %arg0, %c1_i32 : i32
    %1 = arith.addi %0, %arg1 : i32
    %c0_i32 = arith.constant 0 : i32
    %c0_i32_0 = arith.constant 0 : i32
    return %1, %c0_i32 : i32, i32
  }
  func.func @transform_1(%arg0: i32, %arg1: i32) -> (i32, i32) {
    %c1_i32 = arith.constant 1 : i32
    %0 = arith.muli %arg0, %c1_i32 : i32
    %1 = arith.addi %0, %arg1 : i32
    %c0_i32 = arith.constant 0 : i32
    %c0_i32_0 = arith.constant 0 : i32
    return %1, %c0_i32 : i32, i32
  }
  func.func @transform_2(%arg0: i32, %arg1: i32) -> (i32, i32, i32) {
    %c0_i32 = arith.constant 0 : i32
    %c0_i32_0 = arith.constant 0 : i32
    %c0_i32_1 = arith.constant 0 : i32
    return %arg0, %c0_i32, %c0_i32_0 : i32, i32, i32
  }
}

</mosaic_0001>

<llo_original>
// kernel: tpu_custom_call.1
$region0: #{tpu_custom_call.1}
  #allocation0 [shape = 'u32[]', space=smem, size = 0x4, offset = 0x4, fixed_abs, tag = 'smem constant byte address 0x4 - core index']
  #allocation1 [shape = 'u32[144,128]{1,0:T(1,128)}', space=vmem, size = 0x12000, scoped, tag = 'internal scratch']
  %s0 = inlined_call_operand.hbm [shape: f32[16,128], index: 0, kind: input, shape index: {}]
  %s1 = inlined_call_operand.hbm [shape: f32[16,128], index: 1, kind: input, shape index: {}]
  %s2 = inlined_call_operand.hbm [shape: f32[1,8,128], index: 2, kind: output, shape index: {}]
  %s3 = sld [smem:[#allocation0]]
  $region30: #{tpu_custom_call.1} parent=0
    _
  %s5 = ssub.s32 1, %s3
  %s6 = scalar_select 0, %s5, %s3
  $region1: #{tpu_custom_call.1} parent=0
    #allocation2 [shape = 'u8[8192]{0}', space=vmem, size = 0x2000, scoped, tag = 'input window, operand 0, single buffered']
    #allocation3 [shape = 's32[1]{0}', space=sflag, size = 0x4, scoped, tag = 'scoped memory for tpu_custom_call.1']
    #allocation4 [shape = 's32[1]{0}', space=sflag, size = 0x4, scoped, tag = 'scoped memory for tpu_custom_call.1']
    #allocation5 [shape = 'u8[8192]{0}', space=vmem, size = 0x2000, scoped, tag = 'input window, operand 1, single buffered']
    #allocation6 [shape = 's32[1]{0}', space=sflag, size = 0x4, scoped, tag = 'scoped memory for tpu_custom_call.1']
    #allocation7 [shape = 'u8[4096]{0}', space=vmem, size = 0x1000, scoped, tag = 'output window, operand 0, single buffered']
    %7 = vsyncpa [#allocation3], 0
    %8 = vsyncpa [#allocation6], 0
    %9 = vsyncpa [#allocation4], 0
    // Predicated region
    $region2: #{tpu_custom_call.1} parent=1 // pred_check
      _
    $region3: #{tpu_custom_call.1} parent=1 // pred_check_branch
      %11 = sbr.rel (0) target = $region5
    $region4: #{tpu_custom_call.1} parent=1 // pred_region
      %s12 = sadd.s32 0, 0
      %s13 = smul.u32 2, %s12
      %s15 = ssub.s32 256, 256
      %16 = vsyncadd [#allocation3], %s15
      %s17 = smul.addr %s13, 128
      %s18 = scalar_lea.hbm %s0, %s17
      %s19 = sshll.u32 [#allocation2], 4
      %s20 = int_to_ptr.vmem [resolvable:$true] %s19
      %25 = dma.hbm_to_vmem [thread:$0]  %s18, 256, %s20, [#allocation3], 128, 128, 8
    $region5: #{tpu_custom_call.1} parent=1 // pred_fallthru
      _
    // Predicated region
    $region6: #{tpu_custom_call.1} parent=1 // pred_check
      _
    $region7: #{tpu_custom_call.1} parent=1 // pred_check_branch
      %27 = sbr.rel (0) target = $region9
    $region8: #{tpu_custom_call.1} parent=1 // pred_region
      %s28 = sadd.s32 0, 0
      %s29 = smul.u32 2, %s28
      %s31 = ssub.s32 256, 256
      %32 = vsyncadd [#allocation6], %s31
      %s33 = smul.addr %s29, 128
      %s34 = scalar_lea.hbm %s1, %s33
      %s35 = sshll.u32 [#allocation5], 4
      %s36 = int_to_ptr.vmem [resolvable:$true] %s35
      %41 = dma.hbm_to_vmem [thread:$0]  %s34, 256, %s36, [#allocation6], 128, 128, 8
    $region9: #{tpu_custom_call.1} parent=1 // pred_fallthru
      _
    // Predicated region
    $region10: #{tpu_custom_call.1} parent=1 // pred_check
      _
    $region11: #{tpu_custom_call.1} parent=1 // pred_check_branch
      %43 = sbr.rel (0) target = $region13
    $region12: #{tpu_custom_call.1} parent=1 // pred_region
      %44 = dma.done [#allocation3], 256
    $region13: #{tpu_custom_call.1} parent=1 // pred_fallthru
      _
    // Predicated region
    $region14: #{tpu_custom_call.1} parent=1 // pred_check
      _
    $region15: #{tpu_custom_call.1} parent=1 // pred_check_branch
      %46 = sbr.rel (0) target = $region17
    $region16: #{tpu_custom_call.1} parent=1 // pred_region
      %47 = dma.done [#allocation6], 256
    $region17: #{tpu_custom_call.1} parent=1 // pred_fallthru
      _
    %s48 = sadd.s32 0, 0
    %s49 = smul.u32 2, %s48
    %s50 = sadd.s32 0, 0
    %s51 = smul.u32 2, %s50
    %p52 = scmp.eq.s32.totalorder 0, 0
    // Predicated region
    $region18: #{tpu_custom_call.1} parent=1 // pred_check
      %p53 = pneg %p52
    $region19: #{tpu_custom_call.1} parent=1 // pred_check_branch
      %55 = sbr.rel (%p53) target = $region21
    $region20: #{tpu_custom_call.1} parent=1 // pred_region
      %56 = vst [vmem:[#allocation7] sm:$0xff] 0.0
    $region21: #{tpu_custom_call.1} parent=1 // pred_fallthru
      _
    %v57 = vld [vmem:[#allocation2] sm:$0xff]
    %v58 = vld [vmem:[#allocation2 + $0x8] sm:$0xff]
    %v59 = vld [vmem:[#allocation5] sm:$0xff]
    %v60 = vld [vmem:[#allocation5 + $0x8] sm:$0xff]
    %v61 = vsub.f32 %v57, %v59
    %v62 = vsub.f32 %v58, %v60
    %v63 = vld [vmem:[#allocation7] sm:$0xff]
    %v64 = vmul.f32 %v61, %v61
    %v65 = vmul.f32 %v62, %v62
    %v66 = vadd.f32 %v64, %v65
    %v67 = vadd.f32 %v63, %v66
    %68 = vst [vmem:[#allocation7] sm:$0xff] %v67
    // Predicated region
    $region22: #{tpu_custom_call.1} parent=1 // pred_check
      _
    $region23: #{tpu_custom_call.1} parent=1 // pred_check_branch
      %70 = sbr.rel (0) target = $region25
    $region24: #{tpu_custom_call.1} parent=1 // pred_region
      %s72 = ssub.s32 128, 128
      %73 = vsyncadd [#allocation4], %s72
      %s75 = sshll.u32 [#allocation7], 4
      %s76 = int_to_ptr.vmem [resolvable:$true] %s75
      %78 = dma.vmem_to_hbm [thread:$0]  %s76, 128, %s2, [#allocation4]
    $region25: #{tpu_custom_call.1} parent=1 // pred_fallthru
      _
    // Predicated region
    $region26: #{tpu_custom_call.1} parent=1 // pred_check
      _
    $region27: #{tpu_custom_call.1} parent=1 // pred_check_branch
      %80 = sbr.rel (0) target = $region29
    $region28: #{tpu_custom_call.1} parent=1 // pred_region
      %81 = dma.done [#allocation4], 128
    $region29: #{tpu_custom_call.1} parent=1 // pred_fallthru
      _
    %82 = vsyncpa [#allocation3], 1
    %83 = vsyncpa [#allocation6], 1
    %84 = vsyncpa [#allocation4], 1

</llo_original>
